<compile_context>
chip_gen: v5e
topology: v5e:2x2
jax: 0.10.0
libtpu: 0.0.40
codegen_flags: <defaults>
</compile_context>

<pallas_src>
import math
from functools import partial

import jax
import jax.numpy as jnp
from jax import lax
from jax.experimental import pallas as pl
from jax.experimental.pallas import tpu as pltpu

_NEG_INF = -1e30  # finite "minus infinity": avoids inf-inf NaNs in the online-softmax rescale


def _vmem_limit_bytes():
    # Per-generation scoped-VMEM budget: ~75% of physical VMEM (48 MiB on v7x's 64 MiB/TC,
    # 96 MiB on v5e/v6e's 128 MiB), capped at 100 MiB.  Falls back to a v7x-safe value.
    try:
        cap = pltpu.get_tpu_info().vmem_capacity_bytes
    except Exception:
        cap = 64 * 1024 * 1024
    return int(min(cap * 3 // 4, 100 * 1024 * 1024))


def _ln_kv_kernel(x_ref, gamma_ref, beta_ref, wk_ref, bk_ref, wv_ref, bv_ref,
                  k_ref, v_ref, *, eps):
    """Pre-LayerNorm + K/V projections for one (ts, H) sequence tile."""
    x = x_ref[0].astype(jnp.float32)                            # (ts, H) f32 for LN stats
    mean = jnp.mean(x, axis=-1, keepdims=True)
    var = jnp.mean(jnp.square(x - mean), axis=-1, keepdims=True)
    xn = (x - mean) * lax.rsqrt(var + eps) * gamma_ref[...] + beta_ref[...]
    xn_bf = xn.astype(jnp.bfloat16)

    # Two separate dots; bias + cast + store each third immediately so only one (ts, H)
    # f32 intermediate is live at a time (cuts spill traffic vs. a fused (ts, 3H) result).
    k = jnp.dot(xn_bf, wk_ref[...], preferred_element_type=jnp.float32)
    k_ref[0] = (k + bk_ref[...]).astype(jnp.bfloat16)
    v = jnp.dot(xn_bf, wv_ref[...], preferred_element_type=jnp.float32)
    v_ref[0] = (v + bv_ref[...]).astype(jnp.bfloat16)


def _flash_attn_out_kernel(x_ref, k_ref, v_ref, mask_ref,
                           gamma_ref, beta_ref, wq_ref, bq_ref, wo_ref, bo_ref,
                           out_ref,
                           q_sc, m_sc, l_sc, acc_sc,
                           *, num_heads, head_size, eps):
    """Flash-style attention over key tiles + output projection + residual for one query tile."""
    kk = pl.program_id(2)

    @pl.when(kk == 0)
    def _init():
        # Recompute pre-LayerNorm on the query tile (x is resident for the residual anyway)
        # and project Q.  The 1/sqrt(head_size) attention scale is folded into Q in f32,
        # once, so the score path never scales.
        x = x_ref[0].astype(jnp.float32)
        mean = jnp.mean(x, axis=-1, keepdims=True)
        var = jnp.mean(jnp.square(x - mean), axis=-1, keepdims=True)
        xn = (x - mean) * lax.rsqrt(var + eps) * gamma_ref[...] + beta_ref[...]
        q = jnp.dot(xn.astype(jnp.bfloat16), wq_ref[...],
                    preferred_element_type=jnp.float32)
        q = (q + bq_ref[...]) * (1.0 / math.sqrt(head_size))
        q_sc[...] = q.astype(jnp.bfloat16)
        m_sc[...] = jnp.full(m_sc.shape, _NEG_INF, m_sc.dtype)
        l_sc[...] = jnp.zeros(l_sc.shape, l_sc.dtype)
        acc_sc[...] = jnp.zeros(acc_sc.shape, acc_sc.dtype)

    k = k_ref[0]              # (tk, H) bf16
    v = v_ref[0]              # (tk, H) bf16
    mask = mask_ref[0]        # (1, tk) f32 additive, broadcasts over queries
    q = q_sc[...]             # (tq, H) bf16, pre-scaled

    # Static per-head loop of 2-D MXU matmuls on token-major column slices (no
    # (S, nh, d) <-> (nh, S, d) relayouts; only (tq, tk) scores per head are ever live).
    # TODO(synk): for d=64 heads on the 256-wide v6e/v7x MXU, a head-pair (128-lane) slab
    # variant would roughly double MXU utilization of the QK^T / PV matmuls.
    for h in range(num_heads):
        lo = h * head_size
        hi = lo + head_size
        q_h = q[:, lo:hi]                                        # (tq, d) bf16
        k_h = k[:, lo:hi]                                        # (tk, d) bf16
        v_h = v[:, lo:hi]                                        # (tk, d) bf16

        s_h = lax.dot_general(q_h, k_h,
                              dimension_numbers=(((1,), (1,)), ((), ())),
                              preferred_element_type=jnp.float32)  # (tq, tk) f32
        s_h = s_h + mask

        m_old = m_sc[:, h:h + 1]                                 # (tq, 1)
        m_new = jnp.maximum(m_old, jnp.max(s_h, axis=-1, keepdims=True))
        alpha = jnp.exp(m_old - m_new)                           # (tq, 1)
        # TODO(synk): on v6e/v7x (bf16 EUP) this exp could run in bf16; kept f32 for v5e.
        p_h = jnp.exp(s_h - m_new)                               # (tq, tk) f32
        l_sc[:, h:h + 1] = alpha * l_sc[:, h:h + 1] + jnp.sum(p_h, axis=-1, keepdims=True)
        pv = jnp.dot(p_h.astype(jnp.bfloat16), v_h,
                     preferred_element_type=jnp.float32)         # (tq, d) f32
        acc_sc[:, lo:hi] = alpha * acc_sc[:, lo:hi] + pv
        m_sc[:, h:h + 1] = m_new

    @pl.when(kk == pl.num_programs(2) - 1)
    def _finalize():
        # Normalize AFTER the PV matmuls: (tq, d) multiplies per head instead of (tq, S).
        # Exact reciprocal (tensor is tiny now) so softmax rows sum to 1.
        inv_l = pl.reciprocal(l_sc[...], approx=False)           # (tq, nh) f32
        for h in range(num_heads):
            lo = h * head_size
            hi = lo + head_size
            acc_sc[:, lo:hi] = acc_sc[:, lo:hi] * inv_l[:, h:h + 1]
        ctx = acc_sc[...].astype(jnp.bfloat16)                   # (tq, H)
        # Fat output projection + bias + residual with the ORIGINAL hidden states.
        out = jnp.dot(ctx, wo_ref[...], preferred_element_type=jnp.float32)
        out = out + bo_ref[...] + x_ref[0].astype(jnp.float32)
        out_ref[0] = out.astype(out_ref.dtype)


def groupbert_attention(hidden_states, params, attention_mask, *,
                        num_heads, eps=1e-12, q_block=256, k_block=512):
    """hidden_states: (B, S, H); attention_mask: (B, 1, S) additive (0 keep / -1e4 mask)."""
    B, S, H = hidden_states.shape
    assert H % num_heads == 0
    head_size = H // num_heads
    tq = min(q_block, S)
    tk = min(k_block, S)
    assert S % tq == 0 and S % tk == 0, "sequence length must be divisible by the tiles"
    nq = S // tq
    nk = S // tk
    ts, ns = tk, nk                      # kernel-1 sequence tile (no attention -> fat tile)

    # bf16 weights for the MXU (kernels accumulate in f32). Biases/LN params stay f32.
    wq = params["wq"].astype(jnp.bfloat16)
    wk = params["wk"].astype(jnp.bfloat16)
    wv = params["wv"].astype(jnp.bfloat16)
    wo = params["wo"].astype(jnp.bfloat16)

    vmem_limit = _vmem_limit_bytes()

    def _const(shape):
        # Grid-invariant operand: constant block index, single-buffered (no wasted VMEM).
        return pl.BlockSpec(shape, lambda *idx: (0,) * len(shape),
                            pipeline_mode=pl.Buffered(1))

    # ---- Kernel 1: pre-LayerNorm + K/V projections (Q is fused into kernel 2) --------
    k, v = pl.pallas_call(
        partial(_ln_kv_kernel, eps=eps),
        out_shape=(
            jax.ShapeDtypeStruct((B, S, H), jnp.bfloat16),
            jax.ShapeDtypeStruct((B, S, H), jnp.bfloat16),
        ),
        grid_spec=pltpu.PrefetchScalarGridSpec(
            num_scalar_prefetch=0,
            grid=(B, ns),
            in_specs=[
                pl.BlockSpec((1, ts, H), lambda b, j: (b, j, 0)),   # hidden tile
                _const((1, H)),                                     # LN gamma
                _const((1, H)),                                     # LN beta
                _const((H, H)),                                     # Wk (bf16)
                _const((1, H)),                                     # bk
                _const((H, H)),                                     # Wv (bf16)
                _const((1, H)),                                     # bv
            ],
            out_specs=[
                pl.BlockSpec((1, ts, H), lambda b, j: (b, j, 0)),
                pl.BlockSpec((1, ts, H), lambda b, j: (b, j, 0)),
            ],
        ),
        compiler_params=pltpu.CompilerParams(
            dimension_semantics=("parallel", "parallel"),
            vmem_limit_bytes=vmem_limit),
    )(hidden_states, params["ln_gamma"], params["ln_beta"],
      wk, params["bk"], wv, params["bv"])

    # ---- Kernel 2: flash attention over key tiles + output projection + residual -----
    out = pl.pallas_call(
        partial(_flash_attn_out_kernel, num_heads=num_heads,
                head_size=head_size, eps=eps),
        out_shape=jax.ShapeDtypeStruct((B, S, H), hidden_states.dtype),
        grid_spec=pltpu.PrefetchScalarGridSpec(
            num_scalar_prefetch=0,
            grid=(B, nq, nk),
            in_specs=[
                pl.BlockSpec((1, tq, H), lambda b, i, kk: (b, i, 0)),   # x tile (LN src + residual)
                pl.BlockSpec((1, tk, H), lambda b, i, kk: (b, kk, 0)),  # K tile (bf16), streamed
                pl.BlockSpec((1, tk, H), lambda b, i, kk: (b, kk, 0)),  # V tile (bf16), streamed
                pl.BlockSpec((1, 1, tk), lambda b, i, kk: (b, 0, kk)),  # additive mask tile
                _const((1, H)),                                         # LN gamma
                _const((1, H)),                                         # LN beta
                _const((H, H)),                                         # Wq (bf16)
                _const((1, H)),                                         # bq
                _const((H, H)),                                         # Wo (bf16)
                _const((1, H)),                                         # bo
            ],
            out_specs=pl.BlockSpec((1, tq, H), lambda b, i, kk: (b, i, 0)),
            scratch_shapes=[
                pltpu.VMEM((tq, H), jnp.bfloat16),          # Q tile (pre-scaled)
                pltpu.VMEM((tq, num_heads), jnp.float32),   # running max m per head
                pltpu.VMEM((tq, num_heads), jnp.float32),   # running denom l per head
                pltpu.VMEM((tq, H), jnp.float32),           # running context accumulator
            ]),
        compiler_params=pltpu.CompilerParams(
            dimension_semantics=("parallel", "parallel", "arbitrary"),
            vmem_limit_bytes=vmem_limit),
    )(hidden_states, k, v, attention_mask,
      params["ln_gamma"], params["ln_beta"],
      wq, params["bq"], wo, params["bo"])

    # TODO(synk): relative_key / relative_key_query positional embeddings, head_mask,
    # attention-probs dropout and output_attentions are not implemented (eval-mode,
    # absolute position embeddings assumed, matching the default config).
    return out


def _reference(hidden_states, params, attention_mask, *, num_heads, eps=1e-12):
    """Pure-JAX f32 replica of the PyTorch module (eval mode)."""
    B, S, H = hidden_states.shape
    d = H // num_heads
    x = hidden_states
    mean = jnp.mean(x, axis=-1, keepdims=True)
    var = jnp.mean((x - mean) ** 2, axis=-1, keepdims=True)
    xn = (x - mean) / jnp.sqrt(var + eps) * params["ln_gamma"][0] + params["ln_beta"][0]
    q = xn @ params["wq"] + params["bq"][0]
    k = xn @ params["wk"] + params["bk"][0]
    v = xn @ params["wv"] + params["bv"][0]

    def heads(t):  # (B,S,H) -> (B,nh,S,d)
        return t.reshape(B, S, num_heads, d).transpose(0, 2, 1, 3)

    q, k, v = heads(q), heads(k), heads(v)
    scores = jnp.einsum('bhqd,bhkd->bhqk', q, k) / math.sqrt(d)
    scores = scores + attention_mask[:, None, :, :]
    probs = jax.nn.softmax(scores, axis=-1)
    ctx = jnp.einsum('bhqk,bhkd->bhqd', probs, v)
    ctx = ctx.transpose(0, 2, 1, 3).reshape(B, S, H)
    return ctx @ params["wo"] + params["bo"][0] + hidden_states


if __name__ == "__main__":
    B, S, H = 2, 8, 32
    num_heads = 4

    key = jax.random.PRNGKey(0)
    ks = jax.random.split(key, 10)

    hidden_states = jax.random.normal(ks[0], (B, S, H), dtype=jnp.float32)

    # Deterministic synthetic parameters (BERT-like init scale), stored pre-transposed
    # so the kernels compute x @ W.
    params = {
        "ln_gamma": jnp.ones((1, H), jnp.float32),
        "ln_beta": jnp.zeros((1, H), jnp.float32),
        "wq": 0.02 * jax.random.normal(ks[1], (H, H), dtype=jnp.float32),
        "bq": 0.01 * jax.random.normal(ks[2], (1, H), dtype=jnp.float32),
        "wk": 0.02 * jax.random.normal(ks[3], (H, H), dtype=jnp.float32),
        "bk": 0.01 * jax.random.normal(ks[4], (1, H), dtype=jnp.float32),
        "wv": 0.02 * jax.random.normal(ks[5], (H, H), dtype=jnp.float32),
        "bv": 0.01 * jax.random.normal(ks[6], (1, H), dtype=jnp.float32),
        "wo": 0.02 * jax.random.normal(ks[7], (H, H), dtype=jnp.float32),
        "bo": 0.01 * jax.random.normal(ks[8], (1, H), dtype=jnp.float32),
    }

    # Additive attention mask (B, 1, S): 0 = keep, -1e4 = masked (HF BERT convention).
    keep = (jax.random.uniform(ks[9], (B, 1, S)) > 0.2).astype(jnp.float32)
    attention_mask = (1.0 - keep) * -1e4

    out = groupbert_attention(hidden_states, params, attention_mask,
                              num_heads=num_heads)
    out = jax.block_until_ready(out)

    ref = _reference(hidden_states, params, attention_mask, num_heads=num_heads)
    assert out.shape == (B, S, H)
    err = jnp.max(jnp.abs(out - ref))
    # bf16 MXU operands -> loosened tolerance vs the f32 reference.
    assert jnp.allclose(out, ref, atol=2e-2, rtol=2e-2), f"max abs err {err}"

    print("KERNEL_OK")
</pallas_src>

<mosaic_0001>
module attributes {stable_mosaic.version = 11 : i64} {
  func.func @_ln_kv_kernel(%arg0: i32, %arg1: i32, %arg2: memref<1x8x32xf32, #tpu.memory_space<vmem>>, %arg3: memref<1x32xf32, #tpu.memory_space<vmem>>, %arg4: memref<1x32xf32, #tpu.memory_space<vmem>>, %arg5: memref<32x32xbf16, #tpu.memory_space<vmem>>, %arg6: memref<1x32xf32, #tpu.memory_space<vmem>>, %arg7: memref<32x32xbf16, #tpu.memory_space<vmem>>, %arg8: memref<1x32xf32, #tpu.memory_space<vmem>>, %arg9: memref<1x8x32xbf16, #tpu.memory_space<vmem>>, %arg10: memref<1x8x32xbf16, #tpu.memory_space<vmem>>) attributes {dimension_semantics = [#tpu.dimension_semantics<parallel>, #tpu.dimension_semantics<parallel>], iteration_bounds = array<i64: 2, 1>, scalar_prefetch = 0 : i64, scratch_operands = 0 : i64, tpu.core_type = #tpu.core_type<tc>, window_params = [{transform_indices = @transform_0, window_bounds = array<i64: 1, 8, 32>}, {pipeline_mode = #tpu.pipeline_mode<synchronous>, transform_indices = @transform_1, window_bounds = array<i64: 1, 32>}, {pipeline_mode = #tpu.pipeline_mode<synchronous>, transform_indices = @transform_2, window_bounds = array<i64: 1, 32>}, {pipeline_mode = #tpu.pipeline_mode<synchronous>, transform_indices = @transform_3, window_bounds = array<i64: 32, 32>}, {pipeline_mode = #tpu.pipeline_mode<synchronous>, transform_indices = @transform_4, window_bounds = array<i64: 1, 32>}, {pipeline_mode = #tpu.pipeline_mode<synchronous>, transform_indices = @transform_5, window_bounds = array<i64: 32, 32>}, {pipeline_mode = #tpu.pipeline_mode<synchronous>, transform_indices = @transform_6, window_bounds = array<i64: 1, 32>}, {transform_indices = @transform_7, window_bounds = array<i64: 1, 8, 32>}, {transform_indices = @transform_8, window_bounds = array<i64: 1, 8, 32>}]} {
    %c0 = arith.constant 0 : index
    %c0_0 = arith.constant 0 : index
    %c0_1 = arith.constant 0 : index
    %0 = vector.load %arg2[%c0, %c0_0, %c0_1] : memref<1x8x32xf32, #tpu.memory_space<vmem>>, vector<1x8x32xf32>
    %1 = vector.shape_cast %0 : vector<1x8x32xf32> to vector<8x32xf32>
    %cst = arith.constant dense<0.000000e+00> : vector<8xf32>
    %2 = vector.multi_reduction <add>, %1, %cst [1] : vector<8x32xf32> to vector<8xf32>
    %3 = vector.shape_cast %2 : vector<8xf32> to vector<8x1xf32>
    %cst_2 = arith.constant 3.200000e+01 : f32
    %4 = vector.broadcast %cst_2 : f32 to vector<8x1xf32>
    %5 = arith.divf %3, %4 : vector<8x1xf32>
    %6 = vector.broadcast %5 : vector<8x1xf32> to vector<8x32xf32>
    %7 = arith.subf %1, %6 : vector<8x32xf32>
    %8 = arith.mulf %7, %7 : vector<8x32xf32>
    %cst_3 = arith.constant dense<0.000000e+00> : vector<8xf32>
    %9 = vector.multi_reduction <add>, %8, %cst_3 [1] : vector<8x32xf32> to vector<8xf32>
    %10 = vector.shape_cast %9 : vector<8xf32> to vector<8x1xf32>
    %cst_4 = arith.constant 3.200000e+01 : f32
    %11 = vector.broadcast %cst_4 : f32 to vector<8x1xf32>
    %12 = arith.divf %10, %11 : vector<8x1xf32>
    %13 = vector.broadcast %5 : vector<8x1xf32> to vector<8x32xf32>
    %14 = arith.subf %1, %13 : vector<8x32xf32>
    %cst_5 = arith.constant 9.99999996E-13 : f32
    %15 = vector.broadcast %cst_5 : f32 to vector<8x1xf32>
    %16 = arith.addf %12, %15 : vector<8x1xf32>
    %17 = math.rsqrt %16 : vector<8x1xf32>
    %18 = vector.broadcast %17 : vector<8x1xf32> to vector<8x32xf32>
    %19 = arith.mulf %14, %18 : vector<8x32xf32>
    %c0_6 = arith.constant 0 : index
    %c0_7 = arith.constant 0 : index
    %20 = vector.load %arg3[%c0_6, %c0_7] : memref<1x32xf32, #tpu.memory_space<vmem>>, vector<1x32xf32>
    %21 = vector.broadcast %20 : vector<1x32xf32> to vector<8x32xf32>
    %22 = arith.mulf %19, %21 : vector<8x32xf32>
    %c0_8 = arith.constant 0 : index
    %c0_9 = arith.constant 0 : index
    %23 = vector.load %arg4[%c0_8, %c0_9] : memref<1x32xf32, #tpu.memory_space<vmem>>, vector<1x32xf32>
    %24 = vector.broadcast %23 : vector<1x32xf32> to vector<8x32xf32>
    %25 = arith.addf %22, %24 : vector<8x32xf32>
    %26 = arith.truncf %25 : vector<8x32xf32> to vector<8x32xbf16>
    %c0_10 = arith.constant 0 : index
    %c0_11 = arith.constant 0 : index
    %27 = vector.load %arg5[%c0_10, %c0_11] : memref<32x32xbf16, #tpu.memory_space<vmem>>, vector<32x32xbf16>
    %cst_12 = arith.constant dense<0.000000e+00> : vector<8x32xf32>
    %28 = tpu.matmul %26, %27, %cst_12 {dimension_numbers = #tpu.dot_dimension_numbers<[1], [0], [0], [1], [0, 0, 1, 1], [], []>} : vector<8x32xbf16>, vector<32x32xbf16>, vector<8x32xf32> -> vector<8x32xf32>
    %c0_13 = arith.constant 0 : index
    %c0_14 = arith.constant 0 : index
    %29 = vector.load %arg6[%c0_13, %c0_14] : memref<1x32xf32, #tpu.memory_space<vmem>>, vector<1x32xf32>
    %30 = vector.broadcast %29 : vector<1x32xf32> to vector<8x32xf32>
    %31 = arith.addf %28, %30 : vector<8x32xf32>
    %32 = arith.truncf %31 : vector<8x32xf32> to vector<8x32xbf16>
    %c0_15 = arith.constant 0 : index
    %c0_16 = arith.constant 0 : index
    %c0_17 = arith.constant 0 : index
    %33 = vector.load %arg9[%c0_15, %c0_16, %c0_17] : memref<1x8x32xbf16, #tpu.memory_space<vmem>>, vector<1x8x32xbf16>
    %34 = vector.shape_cast %33 : vector<1x8x32xbf16> to vector<8x32xbf16>
    %35 = vector.shape_cast %32 : vector<8x32xbf16> to vector<1x8x32xbf16>
    tpu.vector_store %arg9[%c0_15, %c0_16, %c0_17], %35 {strides = array<i32>} : memref<1x8x32xbf16, #tpu.memory_space<vmem>>, vector<1x8x32xbf16>,
    %c0_18 = arith.constant 0 : index
    %c0_19 = arith.constant 0 : index
    %36 = vector.load %arg7[%c0_18, %c0_19] : memref<32x32xbf16, #tpu.memory_space<vmem>>, vector<32x32xbf16>
    %cst_20 = arith.constant dense<0.000000e+00> : vector<8x32xf32>
    %37 = tpu.matmul %26, %36, %cst_20 {dimension_numbers = #tpu.dot_dimension_numbers<[1], [0], [0], [1], [0, 0, 1, 1], [], []>} : vector<8x32xbf16>, vector<32x32xbf16>, vector<8x32xf32> -> vector<8x32xf32>
    %c0_21 = arith.constant 0 : index
    %c0_22 = arith.constant 0 : index
    %38 = vector.load %arg8[%c0_21, %c0_22] : memref<1x32xf32, #tpu.memory_space<vmem>>, vector<1x32xf32>
    %39 = vector.broadcast %38 : vector<1x32xf32> to vector<8x32xf32>
    %40 = arith.addf %37, %39 : vector<8x32xf32>
    %41 = arith.truncf %40 : vector<8x32xf32> to vector<8x32xbf16>
    %c0_23 = arith.constant 0 : index
    %c0_24 = arith.constant 0 : index
    %c0_25 = arith.constant 0 : index
    %42 = vector.load %arg10[%c0_23, %c0_24, %c0_25] : memref<1x8x32xbf16, #tpu.memory_space<vmem>>, vector<1x8x32xbf16>
    %43 = vector.shape_cast %42 : vector<1x8x32xbf16> to vector<8x32xbf16>
    %44 = vector.shape_cast %41 : vector<8x32xbf16> to vector<1x8x32xbf16>
    tpu.vector_store %arg10[%c0_23, %c0_24, %c0_25], %44 {strides = array<i32>} : memref<1x8x32xbf16, #tpu.memory_space<vmem>>, vector<1x8x32xbf16>,
    return
  }
  func.func @transform_0(%arg0: i32, %arg1: i32) -> (i32, i32, i32) {
    %c0_i32 = arith.constant 0 : i32
    %c0_i32_0 = arith.constant 0 : i32
    return %arg0, %arg1, %c0_i32 : i32, i32, i32
  }
  func.func @transform_1(%arg0: i32, %arg1: i32) -> (i32, i32) {
    %c0_i32 = arith.constant 0 : i32
    %c0_i32_0 = arith.constant 0 : i32
    %c0_i32_1 = arith.constant 0 : i32
    return %c0_i32, %c0_i32_0 : i32, i32
  }
  func.func @transform_2(%arg0: i32, %arg1: i32) -> (i32, i32) {
    %c0_i32 = arith.constant 0 : i32
    %c0_i32_0 = arith.constant 0 : i32
    %c0_i32_1 = arith.constant 0 : i32
    return %c0_i32, %c0_i32_0 : i32, i32
  }
  func.func @transform_3(%arg0: i32, %arg1: i32) -> (i32, i32) {
    %c0_i32 = arith.constant 0 : i32
    %c0_i32_0 = arith.constant 0 : i32
    %c0_i32_1 = arith.constant 0 : i32
    return %c0_i32, %c0_i32_0 : i32, i32
  }
  func.func @transform_4(%arg0: i32, %arg1: i32) -> (i32, i32) {
    %c0_i32 = arith.constant 0 : i32
    %c0_i32_0 = arith.constant 0 : i32
    %c0_i32_1 = arith.constant 0 : i32
    return %c0_i32, %c0_i32_0 : i32, i32
  }
  func.func @transform_5(%arg0: i32, %arg1: i32) -> (i32, i32) {
    %c0_i32 = arith.constant 0 : i32
    %c0_i32_0 = arith.constant 0 : i32
    %c0_i32_1 = arith.constant 0 : i32
    return %c0_i32, %c0_i32_0 : i32, i32
  }
  func.func @transform_6(%arg0: i32, %arg1: i32) -> (i32, i32) {
    %c0_i32 = arith.constant 0 : i32
    %c0_i32_0 = arith.constant 0 : i32
    %c0_i32_1 = arith.constant 0 : i32
    return %c0_i32, %c0_i32_0 : i32, i32
  }
  func.func @transform_7(%arg0: i32, %arg1: i32) -> (i32, i32, i32) {
    %c0_i32 = arith.constant 0 : i32
    %c0_i32_0 = arith.constant 0 : i32
    return %arg0, %arg1, %c0_i32 : i32, i32, i32
  }
  func.func @transform_8(%arg0: i32, %arg1: i32) -> (i32, i32, i32) {
    %c0_i32 = arith.constant 0 : i32
    %c0_i32_0 = arith.constant 0 : i32
    return %arg0, %arg1, %c0_i32 : i32, i32, i32
  }
}

</mosaic_0001>

<llo_original>
// kernel: tpu_custom_call.1
$region0: #{tpu_custom_call.1}
  #allocation0 [shape = 'u32[]', space=smem, size = 0x4, offset = 0x4, fixed_abs, tag = 'smem constant byte address 0x4 - core index']
  #allocation1 [shape = 'u32[72,128]{1,0:T(1,128)}', space=vmem, size = 0x9000, scoped, tag = 'internal scratch']
  %s0 = inlined_call_operand.hbm [shape: f32[2,8,32], index: 0, kind: input, shape index: {}]
  %s1 = inlined_call_operand.hbm [shape: f32[1,32], index: 1, kind: input, shape index: {}]
  %s2 = inlined_call_operand.vmem [shape: f32[1,32], index: 2, kind: input, shape index: {}]
  %s3 = inlined_call_operand.hbm [shape: bf16[32,32], index: 3, kind: input, shape index: {}]
  %s4 = inlined_call_operand.vmem [shape: f32[1,32], index: 4, kind: input, shape index: {}]
  %s5 = inlined_call_operand.hbm [shape: bf16[32,32], index: 5, kind: input, shape index: {}]
  %s6 = inlined_call_operand.vmem [shape: f32[1,32], index: 6, kind: input, shape index: {}]
  %s7 = inlined_call_operand.hbm [shape: bf16[2,8,32], index: 7, kind: output, shape index: {0}]
  %s8 = inlined_call_operand.hbm [shape: bf16[2,8,32], index: 8, kind: output, shape index: {1}]
  %9 = xla_tuple %s7, %s8
  %s10 = sld [smem:[#allocation0]]
  $region85: #{tpu_custom_call.1} parent=0
    _
  %s12 = ssub.s32 1, %s10
  %s13 = scalar_select 0, %s12, %s10
  $region1: #{tpu_custom_call.1} parent=0
    #allocation2 [shape = 'u8[8192]{0}', space=vmem, size = 0x2000, scoped, tag = 'input window, operand 0']
    #allocation3 [shape = 's32[2]{0}', space=sflag, size = 0x8, scoped, tag = 'scoped memory for tpu_custom_call.1']
    #allocation4 [shape = 's32[2]{0}', space=sflag, size = 0x8, scoped, tag = 'scoped memory for tpu_custom_call.1']
    #allocation5 [shape = 'u8[512]{0}', space=vmem, size = 0x400, scoped, tag = 'input window, operand 1, single buffered']
    #allocation6 [shape = 's32[1]{0}', space=sflag, size = 0x4, scoped, tag = 'scoped memory for tpu_custom_call.1']
    #allocation7 [shape = 'u8[8192]{0}', space=vmem, size = 0x2000, scoped, tag = 'input window, operand 3, single buffered']
    #allocation8 [shape = 'u8[8192]{0}', space=vmem, size = 0x2000, scoped, tag = 'input window, operand 5, single buffered']
    #allocation9 [shape = 's32[1]{0}', space=sflag, size = 0x4, scoped, tag = 'scoped memory for tpu_custom_call.1']
    #allocation10 [shape = 'u8[4096]{0}', space=vmem, size = 0x1000, scoped, tag = 'output window, operand 0']
    #allocation11 [shape = 'u8[4096]{0}', space=vmem, size = 0x1000, scoped, tag = 'output window, operand 1']
    #allocation12 [shape = 's32[2]{0}', space=sflag, size = 0x8, scoped, tag = 'scoped memory for tpu_custom_call.1']
    %14 = vsyncpa [#allocation3], 0
    %s15 = scalar_lea.sflag [#allocation3], 1
    %16 = vsyncpa %s15, 0
    %17 = vsyncpa [#allocation6], 0
    %18 = vsyncpa [#allocation9], 0
    %19 = vsyncpa [#allocation4], 0
    %s20 = scalar_lea.sflag [#allocation4], 1
    %21 = vsyncpa %s20, 0
    %22 = vsyncpa [#allocation12], 0
    %s23 = scalar_lea.sflag [#allocation12], 1
    %24 = vsyncpa %s23, 0
    loop: start=0, step=1, limit=4
    $region2: #{tpu_custom_call.1} parent=1 // loop_pre_header
      _
    $region3: #{tpu_custom_call.1} parent=1 // loop_header
      %s26 = sphi 0, %s30
      %p27 = scmp.ge.s32.totalorder %s26, 4
      %s33 = sphi 0, %s45
      %s34 = sphi 0, %s41
      %s35 = sphi 0, %s33
      %s36 = sphi 0, %s34
      %s37 = sphi 0, %s35
      %s38 = sphi 0, %s36
      %s50 = sphi 0, %s52
      %s53 = sphi 0, %s50
      %s54 = sphi 0, %s53
      %s70 = sphi 0, %s54
      %s74 = sphi 0, %s74
      %s76 = sphi 0, %s74
      %s77 = sphi 0, %s76
      %s91 = sphi 0, %s77
      %s95 = sphi 0, %s95
      %s97 = sphi 0, %s95
      %s98 = sphi 0, %s97
      %s112 = sphi 0, %s98
      %s116 = sphi 0, %s116
      %s118 = sphi 0, %s116
      %s119 = sphi 0, %s118
      %s133 = sphi 0, %s119
      %s137 = sphi 0, %s137
      %s139 = sphi 0, %s137
      %s140 = sphi 0, %s139
      %s154 = sphi 0, %s140
      %s158 = sphi 0, %s158
      %s160 = sphi 0, %s158
      %s161 = sphi 0, %s160
      %s175 = sphi 0, %s161
      %s179 = sphi 0, %s179
      %s181 = sphi 0, %s179
      %s182 = sphi 0, %s181
      %s196 = sphi 0, %s182
      %s204 = sphi 0, %s206
      %s207 = sphi 0, %s204
      %s208 = sphi 0, %s207
      %s224 = sphi 0, %s208
      %s232 = sphi 0, %s234
      %s235 = sphi 0, %s232
      %s236 = sphi 0, %s235
      %s252 = sphi 0, %s236
    $region4: #{tpu_custom_call.1} parent=1 // loop_header_branch
      %29 = sbr.rel (%p27) target = $region8
    $region5: #{tpu_custom_call.1} parent=1 // loop_body
      %s31 = ssub.s32 %s26, 1
      %s32 = ssub.s32 %s26, 2
      %s39 = sadd.s32 1, %s34
      %p40 = scmp.ge.s32.totalorder %s39, 1
      %s41 = scalar_select %p40, 0, %s39
      %s42 = sadd.s32 1, %s33
      %s43 = scalar_select %p40, %s42, %s33
      %p44 = scmp.ge.s32.totalorder %s43, 2
      %s45 = scalar_select %p44, 0, %s43
      %s46 = ssub.s32 %s33, %s45
      %s47 = ssub.s32 %s34, %s41
      %s48 = sor.u32 %s46, %s47
      %p49 = scmp.eq.s32.totalorder %s48, 0
      %s51 = sadd.s32 %s50, 1
      %s52 = scalar_select %p49, %s50, %s51
      %p55 = pneg %p49
      %p56 = scmp.eq.s32.totalorder %s26, 1
      %p57 = por %p55, %p56
      %p58 = scmp.ne.s32.totalorder %s50, %s53
      %p59 = scmp.eq.s32.totalorder %s26, 0
      %p60 = por %p58, %p59
      %p61 = scmp.ne.s32.totalorder %s50, %s53
      %p62 = scmp.eq.s32.totalorder %s31, 1
      %p63 = por %p61, %p62
      %p64 = scmp.ne.s32.totalorder %s53, %s54
      %p65 = scmp.eq.s32.totalorder %s31, 0
      %p66 = por %p64, %p65
      %p67 = scmp.ne.s32.totalorder %s53, %s54
      %p68 = scmp.eq.s32.totalorder %s32, 1
      %p69 = por %p67, %p68
      %p71 = scmp.ne.s32.totalorder %s54, %s70
      %p72 = scmp.eq.s32.totalorder %s32, 0
      %p73 = por %p71, %p72
      %s75 = sadd.s32 %s74, 1
      %p78 = scmp.eq.s32.totalorder %s26, 1
      %p79 = scmp.ne.s32.totalorder %s74, %s76
      %p80 = scmp.eq.s32.totalorder %s26, 0
      %p81 = por %p79, %p80
      %p82 = scmp.ne.s32.totalorder %s74, %s76
      %p83 = scmp.eq.s32.totalorder %s31, 1
      %p84 = por %p82, %p83
      %p85 = scmp.ne.s32.totalorder %s76, %s77
      %p86 = scmp.eq.s32.totalorder %s31, 0
      %p87 = por %p85, %p86
      %p88 = scmp.ne.s32.totalorder %s76, %s77
      %p89 = scmp.eq.s32.totalorder %s32, 1
      %p90 = por %p88, %p89
      %p92 = scmp.ne.s32.totalorder %s77, %s91
      %p93 = scmp.eq.s32.totalorder %s32, 0
      %p94 = por %p92, %p93
      %s96 = sadd.s32 %s95, 1
      %p99 = scmp.eq.s32.totalorder %s26, 1
      %p100 = scmp.ne.s32.totalorder %s95, %s97
      %p101 = scmp.eq.s32.totalorder %s26, 0
      %p102 = por %p100, %p101
      %p103 = scmp.ne.s32.totalorder %s95, %s97
      %p104 = scmp.eq.s32.totalorder %s31, 1
      %p105 = por %p103, %p104
      %p106 = scmp.ne.s32.totalorder %s97, %s98
      %p107 = scmp.eq.s32.totalorder %s31, 0
      %p108 = por %p106, %p107
      %p109 = scmp.ne.s32.totalorder %s97, %s98
      %p110 = scmp.eq.s32.totalorder %s32, 1
      %p111 = por %p109, %p110
      %p113 = scmp.ne.s32.totalorder %s98, %s112
      %p114 = scmp.eq.s32.totalorder %s32, 0
      %p115 = por %p113, %p114
      %s117 = sadd.s32 %s116, 1
      %p120 = scmp.eq.s32.totalorder %s26, 1
      %p121 = scmp.ne.s32.totalorder %s116, %s118
      %p122 = scmp.eq.s32.totalorder %s26, 0
      %p123 = por %p121, %p122
      %p124 = scmp.ne.s32.totalorder %s116, %s118
      %p125 = scmp.eq.s32.totalorder %s31, 1
      %p126 = por %p124, %p125
      %p127 = scmp.ne.s32.totalorder %s118, %s119
      %p128 = scmp.eq.s32.totalorder %s31, 0
      %p129 = por %p127, %p128
      %p130 = scmp.ne.s32.totalorder %s118, %s119
      %p131 = scmp.eq.s32.totalorder %s32, 1
      %p132 = por %p130, %p131
      %p134 = scmp.ne.s32.totalorder %s119, %s133
      %p135 = scmp.eq.s32.totalorder %s32, 0
      %p136 = por %p134, %p135
      %s138 = sadd.s32 %s137, 1
      %p141 = scmp.eq.s32.totalorder %s26, 1
      %p142 = scmp.ne.s32.totalorder %s137, %s139
      %p143 = scmp.eq.s32.totalorder %s26, 0
      %p144 = por %p142, %p143
      %p145 = scmp.ne.s32.totalorder %s137, %s139
      %p146 = scmp.eq.s32.totalorder %s31, 1
      %p147 = por %p145, %p146
      %p148 = scmp.ne.s32.totalorder %s139, %s140
      %p149 = scmp.eq.s32.totalorder %s31, 0
      %p150 = por %p148, %p149
      %p151 = scmp.ne.s32.totalorder %s139, %s140
      %p152 = scmp.eq.s32.totalorder %s32, 1
      %p153 = por %p151, %p152
      %p155 = scmp.ne.s32.totalorder %s140, %s154
      %p156 = scmp.eq.s32.totalorder %s32, 0
      %p157 = por %p155, %p156
      %s159 = sadd.s32 %s158, 1
      %p162 = scmp.eq.s32.totalorder %s26, 1
      %p163 = scmp.ne.s32.totalorder %s158, %s160
      %p164 = scmp.eq.s32.totalorder %s26, 0
      %p165 = por %p163, %p164
      %p166 = scmp.ne.s32.totalorder %s158, %s160
      %p167 = scmp.eq.s32.totalorder %s31, 1
      %p168 = por %p166, %p167
      %p169 = scmp.ne.s32.totalorder %s160, %s161
      %p170 = scmp.eq.s32.totalorder %s31, 0
      %p171 = por %p169, %p170
      %p172 = scmp.ne.s32.totalorder %s160, %s161
      %p173 = scmp.eq.s32.totalorder %s32, 1
      %p174 = por %p172, %p173
      %p176 = scmp.ne.s32.totalorder %s161, %s175
      %p177 = scmp.eq.s32.totalorder %s32, 0
      %p178 = por %p176, %p177
      %s180 = sadd.s32 %s179, 1
      %p183 = scmp.eq.s32.totalorder %s26, 1
      %p184 = scmp.ne.s32.totalorder %s179, %s181
      %p185 = scmp.eq.s32.totalorder %s26, 0
      %p186 = por %p184, %p185
      %p187 = scmp.ne.s32.totalorder %s179, %s181
      %p188 = scmp.eq.s32.totalorder %s31, 1
      %p189 = por %p187, %p188
      %p190 = scmp.ne.s32.totalorder %s181, %s182
      %p191 = scmp.eq.s32.totalorder %s31, 0
      %p192 = por %p190, %p191
      %p193 = scmp.ne.s32.totalorder %s181, %s182
      %p194 = scmp.eq.s32.totalorder %s32, 1
      %p195 = por %p193, %p194
      %p197 = scmp.ne.s32.totalorder %s182, %s196
      %p198 = scmp.eq.s32.totalorder %s32, 0
      %p199 = por %p197, %p198
      %s200 = ssub.s32 %s33, %s45
      %s201 = ssub.s32 %s34, %s41
      %s202 = sor.u32 %s200, %s201
      %p203 = scmp.eq.s32.totalorder %s202, 0
      %s205 = sadd.s32 %s204, 1
      %s206 = scalar_select %p203, %s204, %s205
      %p209 = pneg %p203
      %p210 = scmp.eq.s32.totalorder %s26, 1
      %p211 = por %p209, %p210
      %p212 = scmp.ne.s32.totalorder %s204, %s207
      %p213 = scmp.eq.s32.totalorder %s26, 0
      %p214 = por %p212, %p213
      %p215 = scmp.ne.s32.totalorder %s204, %s207
      %p216 = scmp.eq.s32.totalorder %s31, 1
      %p217 = por %p215, %p216
      %p218 = scmp.ne.s32.totalorder %s207, %s208
      %p219 = scmp.eq.s32.totalorder %s31, 0
      %p220 = por %p218, %p219
      %p221 = scmp.ne.s32.totalorder %s207, %s208
      %p222 = scmp.eq.s32.totalorder %s32, 1
      %p223 = por %p221, %p222
      %p225 = scmp.ne.s32.totalorder %s208, %s224
      %p226 = scmp.eq.s32.totalorder %s32, 0
      %p227 = por %p225, %p226
      %s228 = ssub.s32 %s33, %s45
      %s229 = ssub.s32 %s34, %s41
      %s230 = sor.u32 %s228, %s229
      %p231 = scmp.eq.s32.totalorder %s230, 0
      %s233 = sadd.s32 %s232, 1
      %s234 = scalar_select %p231, %s232, %s233
      %p237 = pneg %p231
      %p238 = scmp.eq.s32.totalorder %s26, 1
      %p239 = por %p237, %p238
      %p240 = scmp.ne.s32.totalorder %s232, %s235
      %p241 = scmp.eq.s32.totalorder %s26, 0
      %p242 = por %p240, %p241
      %p243 = scmp.ne.s32.totalorder %s232, %s235
      %p244 = scmp.eq.s32.totalorder %s31, 1
      %p245 = por %p243, %p244
      %p246 = scmp.ne.s32.totalorder %s235, %s236
      %p247 = scmp.eq.s32.totalorder %s31, 0
      %p248 = por %p246, %p247
      %p249 = scmp.ne.s32.totalorder %s235, %s236
      %p250 = scmp.eq.s32.totalorder %s32, 1
      %p251 = por %p249, %p250
      %p253 = scmp.ne.s32.totalorder %s236, %s252
      %p254 = scmp.eq.s32.totalorder %s32, 0
      %p255 = por %p253, %p254
      %p256 = scmp.le.s32.totalorder 1, %s26
      %p257 = scmp.lt.s32.totalorder %s26, 3
      %p258 = pnand %p256, %p257
      %p259 = pneg %p258
      // Predicated region
      $region9: #{tpu_custom_call.1} parent=5 // pred_check
        _
      $region10: #{tpu_custom_call.1} parent=5 // pred_check_branch
        %261 = sbr.rel (%p258) target = $region12
      $region11: #{tpu_custom_call.1} parent=5 // pred_region
        %s262 = ssub.s32 %s26, 1
        // Predicated region
        $region13: #{tpu_custom_call.1} parent=11 // pred_check
          %p263 = pneg %p87
        $region14: #{tpu_custom_call.1} parent=11 // pred_check_branch
          %265 = sbr.rel (%p263) target = $region16
        $region15: #{tpu_custom_call.1} parent=11 // pred_region
          %267 = vsyncadd [#allocation6], 0
          %s269 = sshll.u32 %s1, 4
          %s270 = int_to_ptr.hbm [resolvable:$true] %s269
          %s271 = sshll.u32 [#allocation5], 4
          %s272 = int_to_ptr.vmem [resolvable:$true] %s271
          %274 = dma.hbm_to_vmem [thread:$0]  %s270, 16, %s272, [#allocation6]
        $region16: #{tpu_custom_call.1} parent=11 // pred_fallthru
          _
        // Predicated region
        $region17: #{tpu_custom_call.1} parent=11 // pred_check
          %p275 = pneg %p108
        $region18: #{tpu_custom_call.1} parent=11 // pred_check_branch
          %277 = sbr.rel (%p275) target = $region20
        $region19: #{tpu_custom_call.1} parent=11 // pred_region
          _
        $region20: #{tpu_custom_call.1} parent=11 // pred_fallthru
          _
        // Predicated region
        $region21: #{tpu_custom_call.1} parent=11 // pred_check
          %p278 = pneg %p129
        $region22: #{tpu_custom_call.1} parent=11 // pred_check_branch
          %280 = sbr.rel (%p278) target = $region24
        $region23: #{tpu_custom_call.1} parent=11 // pred_region
          %282 = vsyncadd [#allocation6], 0
          %s283 = sshll.u32 %s3, 4
          %s284 = int_to_ptr.hbm [resolvable:$true] %s283
          %s285 = sshll.u32 [#allocation7], 4
          %s286 = int_to_ptr.vmem [resolvable:$true] %s285
          %291 = dma.hbm_to_vmem [thread:$0]  %s284, 256, %s286, [#allocation6], 64, 64, 4
        $region24: #{tpu_custom_call.1} parent=11 // pred_fallthru
          _
        // Predicated region
        $region25: #{tpu_custom_call.1} parent=11 // pred_check
          %p292 = pneg %p150
        $region26: #{tpu_custom_call.1} parent=11 // pred_check_branch
          %294 = sbr.rel (%p292) target = $region28
        $region27: #{tpu_custom_call.1} parent=11 // pred_region
          _
        $region28: #{tpu_custom_call.1} parent=11 // pred_fallthru
          _
        // Predicated region
        $region29: #{tpu_custom_call.1} parent=11 // pred_check
          %p295 = pneg %p171
        $region30: #{tpu_custom_call.1} parent=11 // pred_check_branch
          %297 = sbr.rel (%p295) target = $region32
        $region31: #{tpu_custom_call.1} parent=11 // pred_region
          %299 = vsyncadd [#allocation9], 0
          %s300 = sshll.u32 %s5, 4
          %s301 = int_to_ptr.hbm [resolvable:$true] %s300
          %s302 = sshll.u32 [#allocation8], 4
          %s303 = int_to_ptr.vmem [resolvable:$true] %s302
          %308 = dma.hbm_to_vmem [thread:$0]  %s301, 256, %s303, [#allocation9], 64, 64, 4
        $region32: #{tpu_custom_call.1} parent=11 // pred_fallthru
          _
        // Predicated region
        $region33: #{tpu_custom_call.1} parent=11 // pred_check
          %p309 = pneg %p192
        $region34: #{tpu_custom_call.1} parent=11 // pred_check_branch
          %311 = sbr.rel (%p309) target = $region36
        $region35: #{tpu_custom_call.1} parent=11 // pred_region
          _
        $region36: #{tpu_custom_call.1} parent=11 // pred_fallthru
          _
      $region12: #{tpu_custom_call.1} parent=5 // pred_fallthru
        _
      %p312 = scmp.lt.s32.totalorder %s26, 2
      // Predicated region
      $region37: #{tpu_custom_call.1} parent=5 // pred_check
        %p313 = pneg %p312
      $region38: #{tpu_custom_call.1} parent=5 // pred_check_branch
        %315 = sbr.rel (%p313) target = $region40
      $region39: #{tpu_custom_call.1} parent=5 // pred_region
        // Predicated region
        $region41: #{tpu_custom_call.1} parent=39 // pred_check
          %p316 = pneg %p60
        $region42: #{tpu_custom_call.1} parent=39 // pred_check_branch
          %318 = sbr.rel (%p316) target = $region44
        $region43: #{tpu_custom_call.1} parent=39 // pred_region
          %s319 = sand.u32 %s50, 1
          %s320 = scalar_lea.sflag [#allocation3], %s319
          %s321 = sand.u32 %s50, 1
          %s322 = smul.addr %s321, 8
          %s323 = scalar_lea.vmem [#allocation2], %s322
          %325 = vsyncadd %s320, 0
          %s326 = sadd.s32 %s34, %s33
          %s327 = smul.addr %s326, 8
          %s328 = scalar_lea.hbm %s0, %s327
          %s330 = sshll.u32 %s328, 4
          %s331 = int_to_ptr.hbm [resolvable:$true] %s330
          %s332 = sshll.u32 %s323, 4
          %s333 = int_to_ptr.vmem [resolvable:$true] %s332
          %335 = dma.hbm_to_vmem [thread:$0]  %s331, 128, %s333, %s320
        $region44: #{tpu_custom_call.1} parent=39 // pred_fallthru
          _
      $region40: #{tpu_custom_call.1} parent=5 // pred_fallthru
        _
      %p336 = scmp.le.s32.totalorder 1, %s26
      %p337 = scmp.lt.s32.totalorder %s26, 3
      %p338 = pnand %p336, %p337
      %p339 = pneg %p338
      // Predicated region
      $region45: #{tpu_custom_call.1} parent=5 // pred_check
        _
      $region46: #{tpu_custom_call.1} parent=5 // pred_check_branch
        %341 = sbr.rel (%p338) target = $region48
      $region47: #{tpu_custom_call.1} parent=5 // pred_region
        %s342 = ssub.s32 %s26, 1
        %s343 = sand.u32 %s53, 1
        %s344 = scalar_lea.sflag [#allocation3], %s343
        %s345 = sand.u32 %s53, 1
        %s346 = smul.addr %s345, 8
        %s347 = scalar_lea.vmem [#allocation2], %s346
        // Predicated region
        $region49: #{tpu_custom_call.1} parent=47 // pred_check
          %p348 = pneg %p66
        $region50: #{tpu_custom_call.1} parent=47 // pred_check_branch
          %350 = sbr.rel (%p348) target = $region52
        $region51: #{tpu_custom_call.1} parent=47 // pred_region
          %352 = dma.done %s344, 128
        $region52: #{tpu_custom_call.1} parent=47 // pred_fallthru
          _
        // Predicated region
        $region53: #{tpu_custom_call.1} parent=47 // pred_check
          %p353 = pneg %p87
        $region54: #{tpu_custom_call.1} parent=47 // pred_check_branch
          %355 = sbr.rel (%p353) target = $region56
        $region55: #{tpu_custom_call.1} parent=47 // pred_region
          %357 = dma.done [#allocation6], 16
        $region56: #{tpu_custom_call.1} parent=47 // pred_fallthru
          _
        // Predicated region
        $region57: #{tpu_custom_call.1} parent=47 // pred_check
          %p358 = pneg %p129
        $region58: #{tpu_custom_call.1} parent=47 // pred_check_branch
          %360 = sbr.rel (%p358) target = $region60
        $region59: #{tpu_custom_call.1} parent=47 // pred_region
          %362 = dma.done [#allocation6], 256
        $region60: #{tpu_custom_call.1} parent=47 // pred_fallthru
          _
        // Predicated region
        $region61: #{tpu_custom_call.1} parent=47 // pred_check
          %p363 = pneg %p171
        $region62: #{tpu_custom_call.1} parent=47 // pred_check_branch
          %365 = sbr.rel (%p363) target = $region64
        $region63: #{tpu_custom_call.1} parent=47 // pred_region
          %367 = dma.done [#allocation9], 256
        $region64: #{tpu_custom_call.1} parent=47 // pred_fallthru
          _
        %s368 = sand.u32 %s53, 1
        %s369 = scalar_lea.sflag [#allocation3], %s368
        %s370 = sand.u32 %s53, 1
        %s371 = smul.addr %s370, 8
        %s372 = scalar_lea.vmem [#allocation2], %s371
        %p373 = pneg %p66
        %p374 = pneg %p63
        %p375 = pneg %p87
        %p376 = pneg %p84
        %p377 = pneg %p108
        %p378 = pneg %p105
        %p379 = pneg %p129
        %p380 = pneg %p126
        %p381 = pneg %p150
        %p382 = pneg %p147
        %p383 = pneg %p171
        %p384 = pneg %p168
        %p385 = pneg %p192
        %p386 = pneg %p189
        %p387 = pneg %p220
        %p388 = pneg %p217
        %s389 = sand.u32 %s207, 1
        %s390 = scalar_lea.sflag [#allocation4], %s389
        %s391 = sand.u32 %s207, 1
        %s392 = smul.addr %s391, 4
        %s393 = scalar_lea.vmem [#allocation10], %s392
        %p394 = pneg %p248
        %p395 = pneg %p245
        %s396 = sand.u32 %s235, 1
        %s397 = scalar_lea.sflag [#allocation12], %s396
        %s398 = sand.u32 %s235, 1
        %s399 = smul.addr %s398, 4
        %s400 = scalar_lea.vmem [#allocation11], %s399
        %v402 = vld [vmem:[%s347] sm:$0xff]
        %vm403 = vcmask 261120
        %v404 = vsel %vm403, %v402, 0.0
        %405 = vadd.xlane.f32.xlu0 %v404
        %v406 = vpop.xlane.xlu0 %405
        %v407 = vrcp.pop 32.0
        %v408 = vmul.f32 32.0, %v407
        %v409 = vsub.f32 1.0, %v408
        %v410 = vmul.f32 %v407, %v409
        %v411 = vadd.f32 %v407, %v410
        %vm412 = vweird.f32 %v407
        %v413 = vsel %vm412, %v407, %v411
        %v414 = vmul.f32 %v406, %v413
        %v415 = vsub.f32 %v402, %v414
        %v416 = vmul.f32 %v415, %v415
        %v417 = vsel %vm403, %v416, 0.0
        %418 = vadd.xlane.f32.xlu0 %v417
        %v419 = vpop.xlane.xlu0 %418
        %v420 = vmul.f32 %v419, %v413
        %v421 = vadd.f32 %v420, 1e-12
        %v422 = vrsqrt.pop %v421
        %v423 = vmul.f32 %v422, %v421
        %v424 = vmul.f32 %v423, %v422
        %v425 = vmul.f32 0.5, %v424
        %v426 = vsub.f32 1.5, %v425
        %v427 = vmul.f32 %v422, %v426
        %vm428 = vweird.f32 %v421
        %vm429 = vweird.f32 %v422
        %vm430 = vmor %vm428, %vm429
        %v431 = vsel %vm430, %v422, %v427
        %v432 = vmul.f32 %v415, %v431
        %v433 = vld [vmem:[#allocation5] sm:$0x1]
        %v435 = vperm.slane %v433, 0
        %v437 = vmul.f32 %v432, %v435
        %v438 = vld [vmem:[%s2] sm:$0x1]
        %v440 = vperm.slane %v438, 0
        %v442 = vadd.f32 %v437, %v440
        %v443 = vpack.c.bf16 %v442, %v442
        %v444 = vld [vmem:[#allocation7] sm:$0xf]
        %v445 = vld [vmem:[#allocation7 + $0x4] sm:$0xf]
        %v446 = vld [vmem:[#allocation7 + $0x8] sm:$0xf]
        %v447 = vld [vmem:[#allocation7 + $0xc] sm:$0xf]
        %v448 = vld [vmem:[%s4] sm:$0x1]
        %v450 = vperm.slane %v448, 0
        %v456 = vunpack.c.l.b16 %v444
        %v457 = vunpack.c.l.b16 %v445
        %v458 = vunpack.c.l.b16 %v446
        %v459 = vunpack.c.l.b16 %v447
        %v460 = vpack.c.b16 %v457, %v456
        %v461 = vpack.c.b16 %v459, %v458
        %v465 = vsel %vm403, %v443, 0
        %467 = vmatpush.bf16.msra.mxu0 0
        %468 = vmatpush.bf16.msra.mxu0 0
        %469 = vmatpush.bf16.msra.mxu0 0
        %470 = vmatpush.bf16.msra.mxu0 0
        %471 = vmatpush.bf16.msra.mxu0 0
        %472 = vmatpush.bf16.msra.mxu0 0
        %473 = vmatpush.bf16.msra.mxu0 %v461
        %474 = vmatpush.bf16.msra.mxu0 %v460
        %475 = vmatmul.bf16.gmra.mxu0 %v465
        %v476 = vpop.f32.mrf.mxu0
        %v477 = vadd.f32 %v450, %v476
        %v478 = vpop.f32.mrf.mxu0
        %479 = vdwg.mxu0
        %v480 = vpack.c.bf16 %v477, %v477
        %vm481 = vcmask 257024
        %482 = vst.msk [vmem:[%s393] sm:$0xf] %vm481, %v480
        %v483 = vld [vmem:[#allocation8] sm:$0xf]
        %v484 = vld [vmem:[#allocation8 + $0x4] sm:$0xf]
        %v485 = vld [vmem:[#allocation8 + $0x8] sm:$0xf]
        %v486 = vld [vmem:[#allocation8 + $0xc] sm:$0xf]
        %v487 = vld [vmem:[%s6] sm:$0x1]
        %v489 = vperm.slane %v487, 0
        %v495 = vunpack.c.l.b16 %v483
        %v496 = vunpack.c.l.b16 %v484
        %v497 = vunpack.c.l.b16 %v485
        %v498 = vunpack.c.l.b16 %v486
        %v499 = vpack.c.b16 %v496, %v495
        %v500 = vpack.c.b16 %v498, %v497
        %503 = vmatpush.bf16.msra.mxu0 0
        %504 = vmatpush.bf16.msra.mxu0 0
        %505 = vmatpush.bf16.msra.mxu0 0
        %506 = vmatpush.bf16.msra.mxu0 0
        %507 = vmatpush.bf16.msra.mxu0 0
        %508 = vmatpush.bf16.msra.mxu0 0
        %509 = vmatpush.bf16.msra.mxu0 %v500
        %510 = vmatpush.bf16.msra.mxu0 %v499
        %511 = vmatmul.bf16.gmra.mxu0 %v465
        %v512 = vpop.f32.mrf.mxu0
        %v513 = vadd.f32 %v489, %v512
        %v514 = vpop.f32.mrf.mxu0
        %515 = vdwg.mxu0
        %v516 = vpack.c.bf16 %v513, %v513
        %517 = vst.msk [vmem:[%s400] sm:$0xf] %vm481, %v516
        %s518 = sand.u32 %s207, 1
        %s519 = scalar_lea.sflag [#allocation4], %s518
        %s520 = sand.u32 %s207, 1
        %s521 = smul.addr %s520, 4
        %s522 = scalar_lea.vmem [#allocation10], %s521
        %s523 = sand.u32 %s235, 1
        %s524 = scalar_lea.sflag [#allocation12], %s523
        %s525 = sand.u32 %s235, 1
        %s526 = smul.addr %s525, 4
        %s527 = scalar_lea.vmem [#allocation11], %s526
        // Predicated region
        $region65: #{tpu_custom_call.1} parent=47 // pred_check
          %p528 = pneg %p217
        $region66: #{tpu_custom_call.1} parent=47 // pred_check_branch
          %530 = sbr.rel (%p528) target = $region68
        $region67: #{tpu_custom_call.1} parent=47 // pred_region
          %532 = vsyncadd %s519, 0
          %s533 = sadd.s32 %s36, %s35
          %s534 = smul.addr %s533, 4
          %s535 = scalar_lea.hbm %s7, %s534
          %s537 = sshll.u32 %s522, 4
          %s538 = int_to_ptr.vmem [resolvable:$true] %s537
          %s539 = sshll.u32 %s535, 4
          %s540 = int_to_ptr.hbm [resolvable:$true] %s539
          %542 = dma.vmem_to_hbm [thread:$0]  %s538, 64, %s540, %s519
        $region68: #{tpu_custom_call.1} parent=47 // pred_fallthru
          _
        // Predicated region
        $region69: #{tpu_custom_call.1} parent=47 // pred_check
          %p543 = pneg %p245
        $region70: #{tpu_custom_call.1} parent=47 // pred_check_branch
          %545 = sbr.rel (%p543) target = $region72
        $region71: #{tpu_custom_call.1} parent=47 // pred_region
          %547 = vsyncadd %s524, 0
          %s548 = sadd.s32 %s36, %s35
          %s549 = smul.addr %s548, 4
          %s550 = scalar_lea.hbm %s8, %s549
          %s552 = sshll.u32 %s527, 4
          %s553 = int_to_ptr.vmem [resolvable:$true] %s552
          %s554 = sshll.u32 %s550, 4
          %s555 = int_to_ptr.hbm [resolvable:$true] %s554
          %557 = dma.vmem_to_hbm [thread:$0]  %s553, 64, %s555, %s524
        $region72: #{tpu_custom_call.1} parent=47 // pred_fallthru
          _
      $region48: #{tpu_custom_call.1} parent=5 // pred_fallthru
        _
      %p558 = scmp.le.s32.totalorder 2, %s26
      // Predicated region
      $region73: #{tpu_custom_call.1} parent=5 // pred_check
        %p559 = pneg %p558
      $region74: #{tpu_custom_call.1} parent=5 // pred_check_branch
        %561 = sbr.rel (%p559) target = $region76
      $region75: #{tpu_custom_call.1} parent=5 // pred_region
        %s562 = ssub.s32 %s26, 2
        // Predicated region
        $region77: #{tpu_custom_call.1} parent=75 // pred_check
          %p563 = pneg %p223
        $region78: #{tpu_custom_call.1} parent=75 // pred_check_branch
          %565 = sbr.rel (%p563) target = $region80
        $region79: #{tpu_custom_call.1} parent=75 // pred_region
          %s566 = sand.u32 %s208, 1
          %s567 = scalar_lea.sflag [#allocation4], %s566
          %s568 = sand.u32 %s208, 1
          %s569 = smul.addr %s568, 4
          %s570 = scalar_lea.vmem [#allocation10], %s569
          %572 = dma.done %s567, 64
        $region80: #{tpu_custom_call.1} parent=75 // pred_fallthru
          _
        // Predicated region
        $region81: #{tpu_custom_call.1} parent=75 // pred_check
          %p573 = pneg %p251
        $region82: #{tpu_custom_call.1} parent=75 // pred_check_branch
          %575 = sbr.rel (%p573) target = $region84
        $region83: #{tpu_custom_call.1} parent=75 // pred_region
          %s576 = sand.u32 %s236, 1
          %s577 = scalar_lea.sflag [#allocation12], %s576
          %s578 = sand.u32 %s236, 1
          %s579 = smul.addr %s578, 4
          %s580 = scalar_lea.vmem [#allocation11], %s579
          %582 = dma.done %s577, 64
        $region84: #{tpu_custom_call.1} parent=75 // pred_fallthru
          _
      $region76: #{tpu_custom_call.1} parent=5 // pred_fallthru
        _
    $region6: #{tpu_custom_call.1} parent=1 // loop_footer
      %s30 = sadd.s32 1, %s26
    $region7: #{tpu_custom_call.1} parent=1 // loop_footer_branch
      %25 = sbr.rel target = $region3
    $region8: #{tpu_custom_call.1} parent=1 // loop_exit
      _
    %583 = vsyncpa [#allocation3], 1
    %s584 = scalar_lea.sflag [#allocation3], 1
    %585 = vsyncpa %s584, 1
    %586 = vsyncpa [#allocation6], 1
    %587 = vsyncpa [#allocation9], 1
    %588 = vsyncpa [#allocation4], 1
    %s589 = scalar_lea.sflag [#allocation4], 1
    %590 = vsyncpa %s589, 1
    %591 = vsyncpa [#allocation12], 1
    %s592 = scalar_lea.sflag [#allocation12], 1
    %593 = vsyncpa %s592, 1

</llo_original>
